<compile_context>
chip_gen: v6e
topology: v6e:2x2x1
jax: 0.10.0
libtpu: 0.0.40
codegen_flags: <defaults>
</compile_context>

<pallas_src>
import functools
import math

import jax
import jax.numpy as jnp
from jax.experimental import pallas as pl
from jax.experimental.pallas import tpu as pltpu


def _round_up(x, m):
    return ((x + m - 1) // m) * m


def linear_clamp_kernel(x_ref, w_ref, b_ref, o_ref, *, min_value, max_value):
    # y = x_fold @ W_fold + b_fold, then clamp_min -> clamp_max (order matters:
    # min_value > max_value collapses everything to max_value, like PyTorch).
    y = jnp.dot(x_ref[...], w_ref[...], preferred_element_type=jnp.float32)
    y = y + b_ref[...]
    y = jnp.maximum(y, min_value)   # clamp_min(min_value)
    y = jnp.minimum(y, max_value)   # clamp_max(max_value)
    o_ref[...] = y.astype(o_ref.dtype)


def _prepare_params(weight, bias, fold):
    """Fold the (out, in) PyTorch weight into a lane-dense block-diagonal matrix."""
    f_out, f_in = weight.shape
    w_t = weight.T.astype(jnp.float32)                            # (in, out)
    w_f = jnp.kron(jnp.eye(fold, dtype=w_t.dtype), w_t)           # (fold*in, fold*out)
    b_f = jnp.tile(bias.astype(jnp.float32), fold).reshape(1, fold * f_out)
    return w_f, b_f


def _forward_impl(x1, w_f, b_f, f_in, f_out, min_value, max_value, fold, tb_rows):
    B = x1.shape[0]
    v0 = x1.reshape(B, -1)                          # flatten(1) -> (B, f_in)
    assert v0.shape[1] == f_in, "flatten(1) width must equal Linear in_features"

    # Pad only to a multiple of `fold` (at most fold-1 rows, usually zero).
    rem = B % fold
    b_pad = B if rem == 0 else B + (fold - rem)
    if b_pad != B:
        v0 = jnp.pad(v0, ((0, b_pad - B), (0, 0)))
    rows_f = b_pad // fold
    x_f = v0.reshape(rows_f, fold * f_in)           # free row-major view, 128 lanes

    # ---- tile selection ------------------------------------------------------
    tb = min(tb_rows, _round_up(rows_f, 8))
    # Keep >= ~4 grid steps when there is enough work (v7x has 2 TCs and the
    # DMA pipeline needs multiple steps), but never shrink below 512 rows.
    min_steps = 4
    tb = min(tb, max(512, _round_up(pl.cdiv(rows_f, min_steps), 8)))
    grid = (pl.cdiv(rows_f, tb),)                   # ragged final block is masked

    kernel = functools.partial(
        linear_clamp_kernel, min_value=min_value, max_value=max_value)

    flops = 2 * rows_f * (fold * f_in) * (fold * f_out)
    bytes_accessed = (rows_f * fold * (f_in + f_out)
                      + (fold * f_in) * (fold * f_out) + fold * f_out) * 4

    out_f = pl.pallas_call(
        kernel,
        out_shape=jax.ShapeDtypeStruct((rows_f, fold * f_out), x1.dtype),
        grid=grid,
        in_specs=[
            pl.BlockSpec((tb, fold * f_in), lambda i: (i, 0)),            # streamed
            pl.BlockSpec((fold * f_in, fold * f_out), lambda i: (0, 0)),  # resident
            pl.BlockSpec((1, fold * f_out), lambda i: (0, 0)),            # resident
        ],
        out_specs=pl.BlockSpec((tb, fold * f_out), lambda i: (i, 0)),
        compiler_params=pltpu.CompilerParams(
            dimension_semantics=("parallel",)),
        cost_estimate=pl.CostEstimate(
            flops=flops, transcendentals=0, bytes_accessed=bytes_accessed),
    )(x_f, w_f, b_f)

    out = out_f.reshape(b_pad, f_out)               # free reshape when b_pad == B
    if b_pad != B:
        out = out[:B]                               # only for B % fold != 0
    return out


def make_model_forward(weight, bias, _max_value=-1.0, _min_value=-1.0,
                       *, fold=2, tb_rows=4096):
    """Hoists the per-call weight prep and returns a jitted forward(x1)."""
    f_out, f_in = weight.shape
    w_f, b_f = _prepare_params(weight, bias, fold)
    minv, maxv = float(_min_value), float(_max_value)

    @jax.jit
    def forward(x1):
        return _forward_impl(x1, w_f, b_f, f_in, f_out, minv, maxv, fold, tb_rows)

    return forward


def model_forward(x1, weight, bias, _max_value=-1.0, _min_value=-1.0,
                  *, fold=2, tb_rows=4096):
    """One-shot convenience matching Model.forward's signature."""
    f_out, f_in = weight.shape
    w_f, b_f = _prepare_params(weight, bias, fold)
    return _forward_impl(x1, w_f, b_f, f_in, f_out,
                         float(_min_value), float(_max_value), fold, tb_rows)


if __name__ == "__main__":
    key = jax.random.PRNGKey(0)
    kx, kw, kb, kx2 = jax.random.split(key, 4)

    # Deterministic Linear(64, 64) parameters (PyTorch layout: (out, in))
    in_f, out_f = 64, 64
    bound = 1.0 / math.sqrt(in_f)
    weight = jax.random.uniform(kw, (out_f, in_f), jnp.float32, -bound, bound)
    bias = jax.random.uniform(kb, (out_f,), jnp.float32, -bound, bound)

    def reference(x, minv, maxv):
        v0 = x.reshape(x.shape[0], -1)
        return jnp.minimum(jnp.maximum(v0 @ weight.T + bias, minv), maxv)

    # Case 1: module defaults (_min=_max=-1), small batch; flatten(1) -> 64.
    # Uses the hoisted/jitted factory path.
    fwd = make_model_forward(weight, bias)
    x1 = jax.random.normal(kx, (2, 8, 8), dtype=jnp.float32)
    out = jax.block_until_ready(fwd(x1))
    assert out.shape == (2, out_f)
    assert jnp.allclose(out, reference(x1, -1.0, -1.0), atol=1e-5, rtol=1e-5)

    # Case 2: distinct clamp bounds + batch not divisible by the fold factor
    # (exercises the minimal fold-padding / slice path and ragged last tile).
    x2 = jax.random.normal(kx2, (21, 8, 8), dtype=jnp.float32)
    out2 = jax.block_until_ready(
        model_forward(x2, weight, bias, _max_value=0.4, _min_value=-0.3))
    assert out2.shape == (21, out_f)
    assert jnp.allclose(out2, reference(x2, -0.3, 0.4), atol=1e-5, rtol=1e-5)

    print("KERNEL_OK")
</pallas_src>

<mosaic_0001>
module attributes {stable_mosaic.version = 11 : i64} {
  func.func @linear_clamp_kernel(%arg0: i32, %arg1: memref<8x128xf32, #tpu.memory_space<vmem>>, %arg2: memref<128x128xf32, #tpu.memory_space<vmem>>, %arg3: memref<1x128xf32, #tpu.memory_space<vmem>>, %arg4: memref<8x128xf32, #tpu.memory_space<vmem>>) attributes {dimension_semantics = [#tpu.dimension_semantics<parallel>], iteration_bounds = array<i64: 1>, scalar_prefetch = 0 : i64, scratch_operands = 0 : i64, tpu.core_type = #tpu.core_type<tc>, window_params = [{transform_indices = @transform_0, window_bounds = array<i64: 8, 128>}, {pipeline_mode = #tpu.pipeline_mode<synchronous>, transform_indices = @transform_1, window_bounds = array<i64: 128, 128>}, {pipeline_mode = #tpu.pipeline_mode<synchronous>, transform_indices = @transform_2, window_bounds = array<i64: 1, 128>}, {transform_indices = @transform_3, window_bounds = array<i64: 8, 128>}]} {
    %c0 = arith.constant 0 : index
    %c0_0 = arith.constant 0 : index
    %0 = vector.load %arg1[%c0, %c0_0] : memref<8x128xf32, #tpu.memory_space<vmem>>, vector<8x128xf32>
    %c0_1 = arith.constant 0 : index
    %c0_2 = arith.constant 0 : index
    %1 = vector.load %arg2[%c0_1, %c0_2] : memref<128x128xf32, #tpu.memory_space<vmem>>, vector<128x128xf32>
    %cst = arith.constant dense<0.000000e+00> : vector<8x128xf32>
    %2 = tpu.matmul %0, %1, %cst {dimension_numbers = #tpu.dot_dimension_numbers<[1], [0], [0], [1], [0, 0, 1, 1], [], []>} : vector<8x128xf32>, vector<128x128xf32>, vector<8x128xf32> -> vector<8x128xf32>
    %c0_3 = arith.constant 0 : index
    %c0_4 = arith.constant 0 : index
    %3 = vector.load %arg3[%c0_3, %c0_4] : memref<1x128xf32, #tpu.memory_space<vmem>>, vector<1x128xf32>
    %4 = vector.broadcast %3 : vector<1x128xf32> to vector<8x128xf32>
    %5 = arith.addf %2, %4 : vector<8x128xf32>
    %cst_5 = arith.constant -1.000000e+00 : f32
    %6 = vector.broadcast %cst_5 : f32 to vector<8x128xf32>
    %7 = arith.maximumf %5, %6 : vector<8x128xf32>
    %cst_6 = arith.constant -1.000000e+00 : f32
    %8 = vector.broadcast %cst_6 : f32 to vector<8x128xf32>
    %9 = arith.minimumf %7, %8 : vector<8x128xf32>
    %c0_7 = arith.constant 0 : index
    %c0_8 = arith.constant 0 : index
    %10 = vector.load %arg4[%c0_7, %c0_8] : memref<8x128xf32, #tpu.memory_space<vmem>>, vector<8x128xf32>
    tpu.vector_store %arg4[%c0_7, %c0_8], %9 {strides = array<i32>} : memref<8x128xf32, #tpu.memory_space<vmem>>, vector<8x128xf32>,
    return
  }
  func.func @transform_0(%arg0: i32) -> (i32, i32) {
    %c0_i32 = arith.constant 0 : i32
    %c0_i32_0 = arith.constant 0 : i32
    return %arg0, %c0_i32 : i32, i32
  }
  func.func @transform_1(%arg0: i32) -> (i32, i32) {
    %c0_i32 = arith.constant 0 : i32
    %c0_i32_0 = arith.constant 0 : i32
    %c0_i32_1 = arith.constant 0 : i32
    return %c0_i32, %c0_i32_0 : i32, i32
  }
  func.func @transform_2(%arg0: i32) -> (i32, i32) {
    %c0_i32 = arith.constant 0 : i32
    %c0_i32_0 = arith.constant 0 : i32
    %c0_i32_1 = arith.constant 0 : i32
    return %c0_i32, %c0_i32_0 : i32, i32
  }
  func.func @transform_3(%arg0: i32) -> (i32, i32) {
    %c0_i32 = arith.constant 0 : i32
    %c0_i32_0 = arith.constant 0 : i32
    return %arg0, %c0_i32 : i32, i32
  }
}

</mosaic_0001>

<llo_original>
// kernel: forward.1
$region0: #{forward.1}
  #allocation0 [shape = 'u32[]', space=smem, size = 0x4, offset = 0x4, fixed_abs, tag = 'smem constant byte address 0x4 - core index']
  #allocation1 [shape = 'u32[144,128]{1,0:T(1,128)}', space=vmem, size = 0x12000, scoped, tag = 'internal scratch']
  %s0 = inlined_call_operand.vmem [shape: f32[1,128], index: 0, kind: input, shape index: {}]
  %s1 = inlined_call_operand.hbm [shape: f32[128,128], index: 1, kind: input, shape index: {}]
  %s2 = inlined_call_operand.vmem [shape: f32[1,128], index: 2, kind: input, shape index: {}]
  %s3 = inlined_call_operand.vmem [shape: f32[1,128], index: 3, kind: output, shape index: {}]
  %s4 = sld [smem:[#allocation0]]
  $region56: #{forward.1} parent=0
    _
  %s6 = ssub.s32 1, %s4
  %s7 = scalar_select 0, %s6, %s4
  $region1: #{forward.1} parent=0
    #allocation2 [shape = 'u8[65536]{0}', space=vmem, size = 0x10000, scoped, tag = 'input window, operand 1, single buffered']
    #allocation3 [shape = 's32[1]{0}', space=sflag, size = 0x4, scoped, tag = 'scoped memory for forward.1']
    #allocation4 [shape = 'u8[4096]{0}', space=vmem, size = 0x1000, scoped, tag = 'output window, operand 0, single buffered']
    %8 = vsyncpa [#allocation3], 0
    // Predicated region
    $region2: #{forward.1} parent=1 // pred_check
      _
    $region3: #{forward.1} parent=1 // pred_check_branch
      %10 = sbr.rel (0) target = $region5
    $region4: #{forward.1} parent=1 // pred_region
      _
    $region5: #{forward.1} parent=1 // pred_fallthru
      _
    // Predicated region
    $region6: #{forward.1} parent=1 // pred_check
      _
    $region7: #{forward.1} parent=1 // pred_check_branch
      %12 = sbr.rel (0) target = $region9
    $region8: #{forward.1} parent=1 // pred_region
      %s14 = ssub.s32 2048, 2048
      %15 = vsyncadd [#allocation3], %s14
      %s16 = sshll.u32 [#allocation2], 4
      %s17 = int_to_ptr.vmem [resolvable:$true] %s16
      %22 = dma.hbm_to_vmem [thread:$0]  %s1, 2048, %s17, [#allocation3], 128, 128, 8
    $region9: #{forward.1} parent=1 // pred_fallthru
      _
    // Predicated region
    $region10: #{forward.1} parent=1 // pred_check
      _
    $region11: #{forward.1} parent=1 // pred_check_branch
      %24 = sbr.rel (0) target = $region13
    $region12: #{forward.1} parent=1 // pred_region
      _
    $region13: #{forward.1} parent=1 // pred_fallthru
      _
    // Predicated region
    $region14: #{forward.1} parent=1 // pred_check
      _
    $region15: #{forward.1} parent=1 // pred_check_branch
      %26 = sbr.rel (0) target = $region17
    $region16: #{forward.1} parent=1 // pred_region
      %27 = dma.done [#allocation3], 2048
    $region17: #{forward.1} parent=1 // pred_fallthru
      _
    %v28 = vld [vmem:[%s0] sm:$0xff]
    %v29 = vld [vmem:[#allocation2] sm:$0xff]
    %v30 = vld [vmem:[#allocation2 + $0x8] sm:$0xff]
    %v31 = vld [vmem:[#allocation2 + $0x10] sm:$0xff]
    %v32 = vld [vmem:[#allocation2 + $0x18] sm:$0xff]
    %v33 = vld [vmem:[#allocation2 + $0x20] sm:$0xff]
    %v34 = vld [vmem:[#allocation2 + $0x28] sm:$0xff]
    %v35 = vld [vmem:[#allocation2 + $0x30] sm:$0xff]
    %v36 = vld [vmem:[#allocation2 + $0x38] sm:$0xff]
    %v37 = vld [vmem:[#allocation2 + $0x40] sm:$0xff]
    %v38 = vld [vmem:[#allocation2 + $0x48] sm:$0xff]
    %v39 = vld [vmem:[#allocation2 + $0x50] sm:$0xff]
    %v40 = vld [vmem:[#allocation2 + $0x58] sm:$0xff]
    %v41 = vld [vmem:[#allocation2 + $0x60] sm:$0xff]
    %v42 = vld [vmem:[#allocation2 + $0x68] sm:$0xff]
    %v43 = vld [vmem:[#allocation2 + $0x70] sm:$0xff]
    %v44 = vld [vmem:[#allocation2 + $0x78] sm:$0xff]
    %v45 = vld [vmem:[%s2] sm:$0x1]
    %v47 = vlaneseq
    %v48 = vshrl.u32 %v47, 7
    %v49 = vsub.s32 0, %v48
    %v50 = vrot.slane %v45, %v49
    %52 = vmatprep.subr.mxu0 0.0
    %53 = vmatpush1.msra.mxu0 %v44
    %54 = vmatprep.subr.mxu0 0.0
    %55 = vmatpush1.msra.mxu0 %v43
    %56 = vmatprep.subr.mxu0 0.0
    %57 = vmatpush1.msra.mxu0 %v42
    %58 = vmatprep.subr.mxu0 0.0
    %59 = vmatpush1.msra.mxu0 %v41
    %60 = vmatprep.subr.mxu0 0.0
    %61 = vmatpush1.msra.mxu0 %v40
    %62 = vmatprep.subr.mxu0 0.0
    %63 = vmatpush1.msra.mxu0 %v39
    %64 = vmatprep.subr.mxu0 0.0
    %65 = vmatpush1.msra.mxu0 %v38
    %66 = vmatprep.subr.mxu0 0.0
    %67 = vmatpush1.msra.mxu0 %v37
    %68 = vmatprep.subr.mxu0 0.0
    %69 = vmatpush1.msra.mxu0 %v36
    %70 = vmatprep.subr.mxu0 0.0
    %71 = vmatpush1.msra.mxu0 %v35
    %72 = vmatprep.subr.mxu0 0.0
    %73 = vmatpush1.msra.mxu0 %v34
    %74 = vmatprep.subr.mxu0 0.0
    %75 = vmatpush1.msra.mxu0 %v33
    %76 = vmatprep.subr.mxu0 0.0
    %77 = vmatpush1.msra.mxu0 %v32
    %78 = vmatprep.subr.mxu0 0.0
    %79 = vmatpush1.msra.mxu0 %v31
    %80 = vmatprep.subr.mxu0 0.0
    %81 = vmatpush1.msra.mxu0 %v30
    %82 = vmatprep.subr.mxu0 0.0
    %83 = vmatpush1.msra.mxu0 %v29
    %84 = vmatprep.subr.mxu0 0.0
    %85 = vmatpush2.msra.mxu0 0.0
    %86 = vmatprep.subr.mxu0 0.0
    %87 = vmatpush2.msra.mxu0 0.0
    %88 = vmatprep.subr.mxu0 0.0
    %89 = vmatpush2.msra.mxu0 0.0
    %90 = vmatprep.subr.mxu0 0.0
    %91 = vmatpush2.msra.mxu0 0.0
    %92 = vmatprep.subr.mxu0 0.0
    %93 = vmatpush2.msra.mxu0 0.0
    %94 = vmatprep.subr.mxu0 0.0
    %95 = vmatpush2.msra.mxu0 0.0
    %96 = vmatprep.subr.mxu0 0.0
    %97 = vmatpush2.msra.mxu0 0.0
    %98 = vmatprep.subr.mxu0 0.0
    %99 = vmatpush2.msra.mxu0 0.0
    %100 = vmatprep.subr.mxu0 0.0
    %101 = vmatpush2.msra.mxu0 0.0
    %102 = vmatprep.subr.mxu0 0.0
    %103 = vmatpush2.msra.mxu0 0.0
    %104 = vmatprep.subr.mxu0 0.0
    %105 = vmatpush2.msra.mxu0 0.0
    %106 = vmatprep.subr.mxu0 0.0
    %107 = vmatpush2.msra.mxu0 0.0
    %108 = vmatprep.subr.mxu0 0.0
    %109 = vmatpush2.msra.mxu0 0.0
    %110 = vmatprep.subr.mxu0 0.0
    %111 = vmatpush2.msra.mxu0 0.0
    %112 = vmatprep.subr.mxu0 0.0
    %113 = vmatpush2.msra.mxu0 0.0
    %114 = vmatprep.subr.mxu0 0.0
    %115 = vmatpush2.msra.mxu0 0.0
    %116 = vmatprep.mubr.f32.mxu0 0.0
    %117 = vmatmul.mubr.f32.gmra.mxu0 %v28
    %v118 = vpop.f32.mrf.mxu0
    %v119 = vadd.f32 %v50, %v118
    %v120 = vpop.f32.mrf.mxu0
    %121 = vdwg.mxu0
    %v122 = vmax.f32 %v119, -1.0
    %v123 = vmin.f32 %v122, -1.0
    %124 = vst [vmem:[#allocation4] sm:$0xff] %v123
    // Predicated region
    $region18: #{forward.1} parent=1 // pred_check
      _
    $region19: #{forward.1} parent=1 // pred_check_branch
      %126 = sbr.rel (0) target = $region21
    $region20: #{forward.1} parent=1 // pred_region
      // Predicated region
      $region22: #{forward.1} parent=20 // pred_check
        _
      $region23: #{forward.1} parent=20 // pred_check_branch
        %128 = sbr.rel (0) target = $region25
      $region24: #{forward.1} parent=20 // pred_region
        // Predicated region
        $region26: #{forward.1} parent=24 // pred_check
          _
        $region27: #{forward.1} parent=24 // pred_check_branch
          %130 = sbr.rel target = $region29
        $region28: #{forward.1} parent=24 // pred_region
          // Predicated region
          $region41: #{forward.1} parent=28 // pred_check
            _
          $region42: #{forward.1} parent=28 // pred_check_branch
            %146 = sbr.rel (0) target = $region44
          $region43: #{forward.1} parent=28 // pred_region
            %s148 = ssub.s32 2, 1
            loop: start=0, step=1, limit=1
            $region45: #{forward.1} parent=43 // loop_pre_header
              _
            $region46: #{forward.1} parent=43 // loop_header
              %s150 = sphi 0, %s154
              %p151 = scmp.ge.s32.totalorder %s150, 1
              %s155 = sphi [#allocation4], [#allocation4]
              %s156 = sphi %s3, %s3
            $region47: #{forward.1} parent=43 // loop_header_branch
              %153 = sbr.rel (%p151) target = $region51
            $region48: #{forward.1} parent=43 // loop_body
              %v157 = vld [vmem:[%s155] sm:%s148]
              %158 = vst [vmem:[%s156] sm:%s148] %v157
            $region49: #{forward.1} parent=43 // loop_footer
              %s154 = sadd.s32 1, %s150
            $region50: #{forward.1} parent=43 // loop_footer_branch
              %149 = sbr.rel target = $region46
            $region51: #{forward.1} parent=43 // loop_exit
              _
          $region44: #{forward.1} parent=28 // pred_fallthru
            _
        $region29: #{forward.1} parent=24 // pred_fallthru
          _
        // Predicated region
        $region30: #{forward.1} parent=24 // pred_check
          _
        $region31: #{forward.1} parent=24 // pred_check_branch
          %132 = sbr.rel (0) target = $region33
        $region32: #{forward.1} parent=24 // pred_region
          %s134 = ssub.s32 2, 1
          loop: start=0, step=1, limit=1
          $region34: #{forward.1} parent=32 // loop_pre_header
            _
          $region35: #{forward.1} parent=32 // loop_header
            %s136 = sphi 0, %s140
            %p137 = scmp.ge.s32.totalorder %s136, 1
            %s141 = sphi [#allocation4], [#allocation4]
            %s142 = sphi %s3, %s3
          $region36: #{forward.1} parent=32 // loop_header_branch
            %139 = sbr.rel (%p137) target = $region40
          $region37: #{forward.1} parent=32 // loop_body
            %v143 = vld [vmem:[%s141] sm:%s134]
            %144 = vst [vmem:[%s142] sm:%s134] %v143
          $region38: #{forward.1} parent=32 // loop_footer
            %s140 = sadd.s32 1, %s136
          $region39: #{forward.1} parent=32 // loop_footer_branch
            %135 = sbr.rel target = $region35
          $region40: #{forward.1} parent=32 // loop_exit
            _
        $region33: #{forward.1} parent=24 // pred_fallthru
          _
      $region25: #{forward.1} parent=20 // pred_fallthru
        _
      %159 = vnop
    $region21: #{forward.1} parent=1 // pred_fallthru
      _
    // Predicated region
    $region52: #{forward.1} parent=1 // pred_check
      _
    $region53: #{forward.1} parent=1 // pred_check_branch
      %161 = sbr.rel (0) target = $region55
    $region54: #{forward.1} parent=1 // pred_region
      _
    $region55: #{forward.1} parent=1 // pred_fallthru
      _
    %162 = vsyncpa [#allocation3], 1

</llo_original>
